<compile_context>
chip_gen: v7x
topology: tpu7x:2x2x1
jax: 0.10.0
libtpu: 0.0.40
codegen_flags: <defaults>
</compile_context>

<pallas_src>
import functools

import jax
import jax.numpy as jnp
from jax.experimental import pallas as pl
from jax.experimental.pallas import tpu as pltpu


def _round_up(x, m):
    return ((x + m - 1) // m) * m


def _pick_tk(i_dim):
    for cand in (1024, 512, 256, 128):
        if i_dim % cand == 0:
            return cand
    return i_dim  # small / odd intermediate dim: whole axis in one block


def _layernorm_epilogue(x, g, beta, eps):
    # Two-pass variance ((x - mu)^2) -> matches torch.nn.LayerNorm numerics.
    inv_h = jnp.float32(1.0 / x.shape[-1])
    mu = jnp.sum(x, axis=-1, keepdims=True) * inv_h
    d = x - mu
    var = jnp.sum(d * d, axis=-1, keepdims=True) * inv_h
    y = d * jax.lax.rsqrt(var + jnp.float32(eps))
    return y * g.astype(jnp.float32) + beta.astype(jnp.float32)


def _fused_kernel(h_ref, w_ref, b_ref, res_ref, g_ref, beta_ref, o_ref,
                  *, eps: float, matmul_dtype):
    # Weight-resident path: single grid axis over row tiles. The full (I, H)
    # weight slab stays in VMEM (constant index_map); activation is cast to
    # the MXU dtype in-kernel so no extra wrapper-side HBM pass is needed.
    x = jnp.dot(h_ref[...].astype(matmul_dtype), w_ref[...],
                preferred_element_type=jnp.float32)
    x = x + b_ref[...].astype(jnp.float32) + res_ref[...].astype(jnp.float32)
    # TODO(synk): dropout is identity in eval/inference mode; training-mode
    # dropout would use pltpu.prng_seed / pltpu.stateful_bernoulli here.
    o_ref[...] = _layernorm_epilogue(
        x, g_ref[...], beta_ref[...], eps).astype(o_ref.dtype)


def _stream_kernel(h_ref, w_ref, b_ref, res_ref, g_ref, beta_ref, o_ref,
                   acc_ref, *, eps: float, matmul_dtype):
    # K-streaming fallback (weight too large for VMEM): accumulate partials in
    # an f32 scratch; init by assignment on k == 0 (no zero-store pass).
    k = pl.program_id(1)
    partial = jnp.dot(h_ref[...].astype(matmul_dtype), w_ref[...],
                      preferred_element_type=jnp.float32)

    @pl.when(k == 0)
    def _():
        acc_ref[...] = partial

    @pl.when(k > 0)
    def _():
        acc_ref[...] += partial

    @pl.when(k == pl.num_programs(1) - 1)
    def _():
        x = (acc_ref[...] + b_ref[...].astype(jnp.float32)
             + res_ref[...].astype(jnp.float32))
        o_ref[...] = _layernorm_epilogue(
            x, g_ref[...], beta_ref[...], eps).astype(o_ref.dtype)


def bert_output(hidden_states, input_tensor, dense_w, dense_b, ln_gamma, ln_beta,
                *, eps=1e-12, tm=256, tk=None, matmul_dtype=jnp.bfloat16,
                out_dtype=None, force_k_stream=False):
    """Fused dense + bias + (eval) dropout + residual + LayerNorm.

    hidden_states: (B, S, I)   input to the dense layer
    input_tensor:  (B, S, H)   residual
    dense_w:       (I, H)      transpose of torch nn.Linear(I, H).weight
    dense_b, ln_gamma, ln_beta: (H,)
    """
    B, S, I = hidden_states.shape
    H = dense_w.shape[1]
    M = B * S
    in_dtype = hidden_states.dtype
    if out_dtype is None:
        out_dtype = in_dtype

    in_bytes = jnp.dtype(in_dtype).itemsize
    out_bytes = jnp.dtype(out_dtype).itemsize
    w_bytes = jnp.dtype(matmul_dtype).itemsize

    # ---- row tile -----------------------------------------------------------
    tm = max(8, _round_up(int(tm), 8))
    tm = min(tm, _round_up(M, 8))           # tiny inputs: don't pad dead rows
    if _round_up(M, tm) // tm < 2 and M > 8:
        # Guarantee >= 2 row tiles so the "parallel" row axis can be split
        # across v7x's two TensorCores.
        tm = max(8, _round_up((M + 1) // 2, 8))
    M_pad = _round_up(M, tm)
    n_row_tiles = M_pad // tm

    # ---- K tile (only used by the streaming fallback) -----------------------
    if tk is None:
        tk = _pick_tk(I)
    if I % tk != 0:
        tk = I
    n_k = I // tk

    # ---- weight-resident decision -------------------------------------------
    resident_footprint = (
        2 * tm * I * in_bytes        # activation tile (double-buffered)
        + 2 * I * H * w_bytes        # resident weight slab (conservative x2)
        + 2 * tm * H * in_bytes      # residual tile
        + 2 * tm * H * out_bytes     # output tile
        + tm * H * 4                 # live f32 matmul result
        + 6 * H * 4                  # bias / gamma / beta
    )
    stream_footprint = (
        2 * tm * tk * in_bytes
        + 2 * tk * H * w_bytes
        + 2 * tm * H * in_bytes
        + 2 * tm * H * out_bytes
        + tm * H * 4                 # f32 accumulator scratch
        + 6 * H * 4
    )
    VMEM_BUDGET = 40 * 1024 * 1024   # headroom under v7x's 64 MiB physical
    weight_resident = (not force_k_stream) and resident_footprint <= VMEM_BUDGET

    footprint = resident_footprint if weight_resident else stream_footprint
    vmem_limit = int(footprint * 1.25) + (2 << 20)
    vmem_limit = min(max(vmem_limit, 4 << 20), 48 << 20)

    # ---- operands (no wrapper-side astype of the big activation) ------------
    h2 = hidden_states.reshape(M, I)
    r2 = input_tensor.reshape(M, H)
    if M_pad != M:
        h2 = jnp.pad(h2, ((0, M_pad - M), (0, 0)))
        r2 = jnp.pad(r2, ((0, M_pad - M), (0, 0)))

    w2 = dense_w.astype(matmul_dtype)          # small, one-time parameter cast
    b2 = dense_b.reshape(1, H).astype(jnp.float32)
    g2 = ln_gamma.reshape(1, H).astype(jnp.float32)
    be2 = ln_beta.reshape(1, H).astype(jnp.float32)

    # ---- cost estimate -------------------------------------------------------
    weight_hbm = I * H * w_bytes * (1 if weight_resident else n_row_tiles)
    bytes_accessed = int(M_pad * I * in_bytes      # activation read
                         + M_pad * H * in_bytes    # residual read
                         + M_pad * H * out_bytes   # output write
                         + weight_hbm
                         + 3 * H * 4)
    cost = pl.CostEstimate(flops=2 * M_pad * I * H,
                           transcendentals=M_pad,   # one rsqrt per row
                           bytes_accessed=bytes_accessed)

    if weight_resident:
        kernel = functools.partial(_fused_kernel, eps=float(eps),
                                   matmul_dtype=matmul_dtype)
        out = pl.pallas_call(
            kernel,
            out_shape=jax.ShapeDtypeStruct((M_pad, H), out_dtype),
            grid_spec=pltpu.PrefetchScalarGridSpec(
                num_scalar_prefetch=0,
                grid=(n_row_tiles,),
                in_specs=[
                    pl.BlockSpec((tm, I), lambda i: (i, 0)),   # activation rows
                    pl.BlockSpec((I, H), lambda i: (0, 0)),    # resident weight
                    pl.BlockSpec((1, H), lambda i: (0, 0)),    # bias
                    pl.BlockSpec((tm, H), lambda i: (i, 0)),   # residual rows
                    pl.BlockSpec((1, H), lambda i: (0, 0)),    # LN gamma
                    pl.BlockSpec((1, H), lambda i: (0, 0)),    # LN beta
                ],
                out_specs=pl.BlockSpec((tm, H), lambda i: (i, 0)),
            ),
            compiler_params=pltpu.CompilerParams(
                dimension_semantics=("parallel",),
                vmem_limit_bytes=vmem_limit,
            ),
            cost_estimate=cost,
        )(h2, w2, b2, r2, g2, be2)
    else:
        kernel = functools.partial(_stream_kernel, eps=float(eps),
                                   matmul_dtype=matmul_dtype)
        out = pl.pallas_call(
            kernel,
            out_shape=jax.ShapeDtypeStruct((M_pad, H), out_dtype),
            grid_spec=pltpu.PrefetchScalarGridSpec(
                num_scalar_prefetch=0,
                grid=(n_row_tiles, n_k),
                in_specs=[
                    pl.BlockSpec((tm, tk), lambda i, k: (i, k)),  # act rows/K
                    pl.BlockSpec((tk, H), lambda i, k: (k, 0)),   # weight K-slab
                    pl.BlockSpec((1, H), lambda i, k: (0, 0)),    # bias
                    pl.BlockSpec((tm, H), lambda i, k: (i, 0)),   # residual rows
                    pl.BlockSpec((1, H), lambda i, k: (0, 0)),    # LN gamma
                    pl.BlockSpec((1, H), lambda i, k: (0, 0)),    # LN beta
                ],
                out_specs=pl.BlockSpec((tm, H), lambda i, k: (i, 0)),
                scratch_shapes=[pltpu.VMEM((tm, H), jnp.float32)],
            ),
            compiler_params=pltpu.CompilerParams(
                dimension_semantics=("parallel", "arbitrary"),
                vmem_limit_bytes=vmem_limit,
            ),
            cost_estimate=cost,
        )(h2, w2, b2, r2, g2, be2)

    if M_pad != M:
        out = out[:M]
    return out.reshape(B, S, H)


def _reference(hidden_states, input_tensor, dense_w, dense_b, ln_gamma, ln_beta, eps):
    x = jnp.einsum("bsi,ih->bsh", hidden_states, dense_w,
                   preferred_element_type=jnp.float32) + dense_b
    x = x + input_tensor
    mu = jnp.mean(x, axis=-1, keepdims=True)
    var = jnp.mean((x - mu) ** 2, axis=-1, keepdims=True)
    return (x - mu) * jax.lax.rsqrt(var + eps) * ln_gamma + ln_beta


if __name__ == "__main__":
    # Small BERT-ish config: batch=2, seq=9 (exercises row padding + the
    # 2-row-tile split), intermediate=256, hidden=128.
    B, S, I, H = 2, 9, 256, 128
    eps = 1e-12

    key = jax.random.PRNGKey(0)
    k1, k2, k3, k4 = jax.random.split(key, 4)

    hidden_states = jax.random.normal(k1, (B, S, I), dtype=jnp.float32)
    input_tensor = jax.random.normal(k2, (B, S, H), dtype=jnp.float32)

    # Parameter shapes follow nn.Linear(I, H) (stored transposed) & LayerNorm(H)
    dense_w = jax.random.normal(k3, (I, H), dtype=jnp.float32) * 0.02
    dense_b = jax.random.normal(k4, (H,), dtype=jnp.float32) * 0.02
    ln_gamma = jnp.ones((H,), dtype=jnp.float32)
    ln_beta = jnp.zeros((H,), dtype=jnp.float32)

    ref = _reference(hidden_states, input_tensor, dense_w, dense_b,
                     ln_gamma, ln_beta, eps)

    # 1) Weight-resident fast path (the one used for real BERT shapes).
    out = bert_output(hidden_states, input_tensor, dense_w, dense_b,
                      ln_gamma, ln_beta, eps=eps)
    out = jax.block_until_ready(out)
    assert out.shape == (B, S, H)
    # bf16 matmul operands -> loosened tolerance vs the f32 reference.
    assert jnp.allclose(out, ref, atol=2e-2, rtol=2e-2)

    # 2) K-streaming fallback path (forced; 2 K steps with tk=128).
    out_s = bert_output(hidden_states, input_tensor, dense_w, dense_b,
                        ln_gamma, ln_beta, eps=eps, tk=128, force_k_stream=True)
    out_s = jax.block_until_ready(out_s)
    assert out_s.shape == (B, S, H)
    assert jnp.allclose(out_s, ref, atol=2e-2, rtol=2e-2)

    print("KERNEL_OK")
</pallas_src>

<mosaic_0001>
module attributes {stable_mosaic.version = 11 : i64} {
  func.func @_fused_kernel(%arg0: i32, %arg1: memref<16x256xf32, #tpu.memory_space<vmem>>, %arg2: memref<256x128xbf16, #tpu.memory_space<vmem>>, %arg3: memref<1x128xf32, #tpu.memory_space<vmem>>, %arg4: memref<16x128xf32, #tpu.memory_space<vmem>>, %arg5: memref<1x128xf32, #tpu.memory_space<vmem>>, %arg6: memref<1x128xf32, #tpu.memory_space<vmem>>, %arg7: memref<16x128xf32, #tpu.memory_space<vmem>>) attributes {dimension_semantics = [#tpu.dimension_semantics<parallel>], iteration_bounds = array<i64: 2>, scalar_prefetch = 0 : i64, scratch_operands = 0 : i64, tpu.core_type = #tpu.core_type<tc>, window_params = [{transform_indices = @transform_0, window_bounds = array<i64: 16, 256>}, {pipeline_mode = #tpu.pipeline_mode<synchronous>, transform_indices = @transform_1, window_bounds = array<i64: 256, 128>}, {pipeline_mode = #tpu.pipeline_mode<synchronous>, transform_indices = @transform_2, window_bounds = array<i64: 1, 128>}, {transform_indices = @transform_3, window_bounds = array<i64: 16, 128>}, {pipeline_mode = #tpu.pipeline_mode<synchronous>, transform_indices = @transform_4, window_bounds = array<i64: 1, 128>}, {pipeline_mode = #tpu.pipeline_mode<synchronous>, transform_indices = @transform_5, window_bounds = array<i64: 1, 128>}, {transform_indices = @transform_6, window_bounds = array<i64: 16, 128>}]} {
    %c0 = arith.constant 0 : index
    %c0_0 = arith.constant 0 : index
    %0 = vector.load %arg1[%c0, %c0_0] : memref<16x256xf32, #tpu.memory_space<vmem>>, vector<16x256xf32>
    %1 = arith.truncf %0 : vector<16x256xf32> to vector<16x256xbf16>
    %c0_1 = arith.constant 0 : index
    %c0_2 = arith.constant 0 : index
    %2 = vector.load %arg2[%c0_1, %c0_2] : memref<256x128xbf16, #tpu.memory_space<vmem>>, vector<256x128xbf16>
    %cst = arith.constant dense<0.000000e+00> : vector<16x128xf32>
    %3 = tpu.matmul %1, %2, %cst {dimension_numbers = #tpu.dot_dimension_numbers<[1], [0], [0], [1], [0, 0, 1, 1], [], []>} : vector<16x256xbf16>, vector<256x128xbf16>, vector<16x128xf32> -> vector<16x128xf32>
    %c0_3 = arith.constant 0 : index
    %c0_4 = arith.constant 0 : index
    %4 = vector.load %arg3[%c0_3, %c0_4] : memref<1x128xf32, #tpu.memory_space<vmem>>, vector<1x128xf32>
    %5 = vector.broadcast %4 : vector<1x128xf32> to vector<16x128xf32>
    %6 = arith.addf %3, %5 : vector<16x128xf32>
    %c0_5 = arith.constant 0 : index
    %c0_6 = arith.constant 0 : index
    %7 = vector.load %arg4[%c0_5, %c0_6] : memref<16x128xf32, #tpu.memory_space<vmem>>, vector<16x128xf32>
    %8 = arith.addf %6, %7 : vector<16x128xf32>
    %c0_7 = arith.constant 0 : index
    %c0_8 = arith.constant 0 : index
    %9 = vector.load %arg5[%c0_7, %c0_8] : memref<1x128xf32, #tpu.memory_space<vmem>>, vector<1x128xf32>
    %c0_9 = arith.constant 0 : index
    %c0_10 = arith.constant 0 : index
    %10 = vector.load %arg6[%c0_9, %c0_10] : memref<1x128xf32, #tpu.memory_space<vmem>>, vector<1x128xf32>
    %cst_11 = arith.constant dense<0.000000e+00> : vector<16xf32>
    %11 = vector.multi_reduction <add>, %8, %cst_11 [1] : vector<16x128xf32> to vector<16xf32>
    %12 = vector.shape_cast %11 : vector<16xf32> to vector<16x1xf32>
    %cst_12 = arith.constant 7.812500e-03 : f32
    %13 = vector.broadcast %cst_12 : f32 to vector<16x1xf32>
    %14 = arith.mulf %12, %13 : vector<16x1xf32>
    %15 = vector.broadcast %14 : vector<16x1xf32> to vector<16x128xf32>
    %16 = arith.subf %8, %15 : vector<16x128xf32>
    %17 = arith.mulf %16, %16 : vector<16x128xf32>
    %cst_13 = arith.constant dense<0.000000e+00> : vector<16xf32>
    %18 = vector.multi_reduction <add>, %17, %cst_13 [1] : vector<16x128xf32> to vector<16xf32>
    %19 = vector.shape_cast %18 : vector<16xf32> to vector<16x1xf32>
    %cst_14 = arith.constant 7.812500e-03 : f32
    %20 = vector.broadcast %cst_14 : f32 to vector<16x1xf32>
    %21 = arith.mulf %19, %20 : vector<16x1xf32>
    %cst_15 = arith.constant 9.99999996E-13 : f32
    %22 = vector.broadcast %cst_15 : f32 to vector<16x1xf32>
    %23 = arith.addf %21, %22 : vector<16x1xf32>
    %24 = math.rsqrt %23 : vector<16x1xf32>
    %25 = vector.broadcast %24 : vector<16x1xf32> to vector<16x128xf32>
    %26 = arith.mulf %16, %25 : vector<16x128xf32>
    %27 = vector.broadcast %9 : vector<1x128xf32> to vector<16x128xf32>
    %28 = arith.mulf %26, %27 : vector<16x128xf32>
    %29 = vector.broadcast %10 : vector<1x128xf32> to vector<16x128xf32>
    %30 = arith.addf %28, %29 : vector<16x128xf32>
    %c0_16 = arith.constant 0 : index
    %c0_17 = arith.constant 0 : index
    %31 = vector.load %arg7[%c0_16, %c0_17] : memref<16x128xf32, #tpu.memory_space<vmem>>, vector<16x128xf32>
    tpu.vector_store %arg7[%c0_16, %c0_17], %30 {strides = array<i32>} : memref<16x128xf32, #tpu.memory_space<vmem>>, vector<16x128xf32>,
    return
  }
  func.func @transform_0(%arg0: i32) -> (i32, i32) {
    %c0_i32 = arith.constant 0 : i32
    %c0_i32_0 = arith.constant 0 : i32
    return %arg0, %c0_i32 : i32, i32
  }
  func.func @transform_1(%arg0: i32) -> (i32, i32) {
    %c0_i32 = arith.constant 0 : i32
    %c0_i32_0 = arith.constant 0 : i32
    %c0_i32_1 = arith.constant 0 : i32
    return %c0_i32, %c0_i32_0 : i32, i32
  }
  func.func @transform_2(%arg0: i32) -> (i32, i32) {
    %c0_i32 = arith.constant 0 : i32
    %c0_i32_0 = arith.constant 0 : i32
    %c0_i32_1 = arith.constant 0 : i32
    return %c0_i32, %c0_i32_0 : i32, i32
  }
  func.func @transform_3(%arg0: i32) -> (i32, i32) {
    %c0_i32 = arith.constant 0 : i32
    %c0_i32_0 = arith.constant 0 : i32
    return %arg0, %c0_i32 : i32, i32
  }
  func.func @transform_4(%arg0: i32) -> (i32, i32) {
    %c0_i32 = arith.constant 0 : i32
    %c0_i32_0 = arith.constant 0 : i32
    %c0_i32_1 = arith.constant 0 : i32
    return %c0_i32, %c0_i32_0 : i32, i32
  }
  func.func @transform_5(%arg0: i32) -> (i32, i32) {
    %c0_i32 = arith.constant 0 : i32
    %c0_i32_0 = arith.constant 0 : i32
    %c0_i32_1 = arith.constant 0 : i32
    return %c0_i32, %c0_i32_0 : i32, i32
  }
  func.func @transform_6(%arg0: i32) -> (i32, i32) {
    %c0_i32 = arith.constant 0 : i32
    %c0_i32_0 = arith.constant 0 : i32
    return %arg0, %c0_i32 : i32, i32
  }
}

</mosaic_0001>

<llo_original>
// kernel: tpu_custom_call.1
$region0: #{tpu_custom_call.1}
  #allocation0 [shape = 'u32[]', space=smem, size = 0x4, offset = 0x4, fixed_abs, tag = 'smem constant byte address 0x4 - core index']
  #allocation1 [shape = 'u32[144,128]{1,0:T(1,128)}', space=vmem, size = 0x12000, scoped, tag = 'internal scratch']
  %s0 = inlined_call_operand.hbm [shape: f32[32,256], index: 0, kind: input, shape index: {}]
  %s1 = inlined_call_operand.hbm [shape: bf16[256,128], index: 1, kind: input, shape index: {}]
  %s2 = inlined_call_operand.vmem [shape: f32[1,128], index: 2, kind: input, shape index: {}]
  %s3 = inlined_call_operand.hbm [shape: f32[32,128], index: 3, kind: input, shape index: {}]
  %s4 = inlined_call_operand.vmem [shape: f32[1,128], index: 4, kind: input, shape index: {}]
  %s5 = inlined_call_operand.vmem [shape: f32[1,128], index: 5, kind: input, shape index: {}]
  %s6 = inlined_call_operand.hbm [shape: f32[32,128], index: 6, kind: output, shape index: {}]
  %s7 = sld [smem:[#allocation0]]
  $region69: #{tpu_custom_call.1} parent=0
    _
  %s9 = ssub.s32 1, %s7
  %s10 = scalar_select 0, %s9, %s7
  $region1: #{tpu_custom_call.1} parent=0
    #allocation2 [shape = 'u8[32768]{0}', space=vmem, size = 0x8000, scoped, tag = 'input window, operand 0']
    #allocation3 [shape = 's32[2]{0}', space=sflag, size = 0x8, scoped, tag = 'scoped memory for tpu_custom_call.1']
    #allocation4 [shape = 's32[2]{0}', space=sflag, size = 0x8, scoped, tag = 'scoped memory for tpu_custom_call.1']
    #allocation5 [shape = 'u8[65536]{0}', space=vmem, size = 0x10000, scoped, tag = 'input window, operand 1, single buffered']
    #allocation6 [shape = 's32[1]{0}', space=sflag, size = 0x4, scoped, tag = 'scoped memory for tpu_custom_call.1']
    #allocation7 [shape = 'u8[16384]{0}', space=vmem, size = 0x4000, scoped, tag = 'input window, operand 3']
    #allocation8 [shape = 'u8[16384]{0}', space=vmem, size = 0x4000, scoped, tag = 'output window, operand 0']
    %11 = vsyncpa [#allocation3], 0
    %s12 = scalar_lea.sflag [#allocation3], 1
    %13 = vsyncpa %s12, 0
    %14 = vsyncpa [#allocation6], 0
    %15 = vsyncpa [#allocation4], 0
    %s16 = scalar_lea.sflag [#allocation4], 1
    %17 = vsyncpa %s16, 0
    loop: start=0, step=1, limit=4
    $region2: #{tpu_custom_call.1} parent=1 // loop_pre_header
      _
    $region3: #{tpu_custom_call.1} parent=1 // loop_header
      %s19 = sphi 0, %s23
      %p20 = scmp.ge.s32.totalorder %s19, 4
      %s29 = sphi 0, %s31
      %s32 = sphi 0, %s29
      %s33 = sphi 0, %s32
      %s49 = sphi 0, %s33
      %s53 = sphi 0, %s53
      %s55 = sphi 0, %s53
      %s56 = sphi 0, %s55
      %s70 = sphi 0, %s56
      %s74 = sphi 0, %s74
      %s76 = sphi 0, %s74
      %s77 = sphi 0, %s76
      %s91 = sphi 0, %s77
      %s97 = sphi 0, %s99
      %s100 = sphi 0, %s97
      %s101 = sphi 0, %s100
      %s117 = sphi 0, %s101
      %s121 = sphi 0, %s121
      %s123 = sphi 0, %s121
      %s124 = sphi 0, %s123
      %s138 = sphi 0, %s124
      %s142 = sphi 0, %s142
      %s144 = sphi 0, %s142
      %s145 = sphi 0, %s144
      %s159 = sphi 0, %s145
      %s165 = sphi 0, %s167
      %s168 = sphi 0, %s165
      %s169 = sphi 0, %s168
      %s185 = sphi 0, %s169
    $region4: #{tpu_custom_call.1} parent=1 // loop_header_branch
      %22 = sbr.rel (%p20) target = $region8
    $region5: #{tpu_custom_call.1} parent=1 // loop_body
      %s24 = ssub.s32 %s19, 1
      %s25 = ssub.s32 %s19, 2
      %s26 = sadd.s32 %s19, 1
      %s27 = ssub.s32 %s19, %s26
      %p28 = scmp.eq.s32.totalorder %s27, 0
      %s30 = sadd.s32 %s29, 1
      %s31 = scalar_select %p28, %s29, %s30
      %p34 = pneg %p28
      %p35 = scmp.eq.s32.totalorder %s19, 1
      %p36 = por %p34, %p35
      %p37 = scmp.ne.s32.totalorder %s29, %s32
      %p38 = scmp.eq.s32.totalorder %s19, 0
      %p39 = por %p37, %p38
      %p40 = scmp.ne.s32.totalorder %s29, %s32
      %p41 = scmp.eq.s32.totalorder %s24, 1
      %p42 = por %p40, %p41
      %p43 = scmp.ne.s32.totalorder %s32, %s33
      %p44 = scmp.eq.s32.totalorder %s24, 0
      %p45 = por %p43, %p44
      %p46 = scmp.ne.s32.totalorder %s32, %s33
      %p47 = scmp.eq.s32.totalorder %s25, 1
      %p48 = por %p46, %p47
      %p50 = scmp.ne.s32.totalorder %s33, %s49
      %p51 = scmp.eq.s32.totalorder %s25, 0
      %p52 = por %p50, %p51
      %s54 = sadd.s32 %s53, 1
      %p57 = scmp.eq.s32.totalorder %s19, 1
      %p58 = scmp.ne.s32.totalorder %s53, %s55
      %p59 = scmp.eq.s32.totalorder %s19, 0
      %p60 = por %p58, %p59
      %p61 = scmp.ne.s32.totalorder %s53, %s55
      %p62 = scmp.eq.s32.totalorder %s24, 1
      %p63 = por %p61, %p62
      %p64 = scmp.ne.s32.totalorder %s55, %s56
      %p65 = scmp.eq.s32.totalorder %s24, 0
      %p66 = por %p64, %p65
      %p67 = scmp.ne.s32.totalorder %s55, %s56
      %p68 = scmp.eq.s32.totalorder %s25, 1
      %p69 = por %p67, %p68
      %p71 = scmp.ne.s32.totalorder %s56, %s70
      %p72 = scmp.eq.s32.totalorder %s25, 0
      %p73 = por %p71, %p72
      %s75 = sadd.s32 %s74, 1
      %p78 = scmp.eq.s32.totalorder %s19, 1
      %p79 = scmp.ne.s32.totalorder %s74, %s76
      %p80 = scmp.eq.s32.totalorder %s19, 0
      %p81 = por %p79, %p80
      %p82 = scmp.ne.s32.totalorder %s74, %s76
      %p83 = scmp.eq.s32.totalorder %s24, 1
      %p84 = por %p82, %p83
      %p85 = scmp.ne.s32.totalorder %s76, %s77
      %p86 = scmp.eq.s32.totalorder %s24, 0
      %p87 = por %p85, %p86
      %p88 = scmp.ne.s32.totalorder %s76, %s77
      %p89 = scmp.eq.s32.totalorder %s25, 1
      %p90 = por %p88, %p89
      %p92 = scmp.ne.s32.totalorder %s77, %s91
      %p93 = scmp.eq.s32.totalorder %s25, 0
      %p94 = por %p92, %p93
      %s95 = ssub.s32 %s19, %s26
      %p96 = scmp.eq.s32.totalorder %s95, 0
      %s98 = sadd.s32 %s97, 1
      %s99 = scalar_select %p96, %s97, %s98
      %p102 = pneg %p96
      %p103 = scmp.eq.s32.totalorder %s19, 1
      %p104 = por %p102, %p103
      %p105 = scmp.ne.s32.totalorder %s97, %s100
      %p106 = scmp.eq.s32.totalorder %s19, 0
      %p107 = por %p105, %p106
      %p108 = scmp.ne.s32.totalorder %s97, %s100
      %p109 = scmp.eq.s32.totalorder %s24, 1
      %p110 = por %p108, %p109
      %p111 = scmp.ne.s32.totalorder %s100, %s101
      %p112 = scmp.eq.s32.totalorder %s24, 0
      %p113 = por %p111, %p112
      %p114 = scmp.ne.s32.totalorder %s100, %s101
      %p115 = scmp.eq.s32.totalorder %s25, 1
      %p116 = por %p114, %p115
      %p118 = scmp.ne.s32.totalorder %s101, %s117
      %p119 = scmp.eq.s32.totalorder %s25, 0
      %p120 = por %p118, %p119
      %s122 = sadd.s32 %s121, 1
      %p125 = scmp.eq.s32.totalorder %s19, 1
      %p126 = scmp.ne.s32.totalorder %s121, %s123
      %p127 = scmp.eq.s32.totalorder %s19, 0
      %p128 = por %p126, %p127
      %p129 = scmp.ne.s32.totalorder %s121, %s123
      %p130 = scmp.eq.s32.totalorder %s24, 1
      %p131 = por %p129, %p130
      %p132 = scmp.ne.s32.totalorder %s123, %s124
      %p133 = scmp.eq.s32.totalorder %s24, 0
      %p134 = por %p132, %p133
      %p135 = scmp.ne.s32.totalorder %s123, %s124
      %p136 = scmp.eq.s32.totalorder %s25, 1
      %p137 = por %p135, %p136
      %p139 = scmp.ne.s32.totalorder %s124, %s138
      %p140 = scmp.eq.s32.totalorder %s25, 0
      %p141 = por %p139, %p140
      %s143 = sadd.s32 %s142, 1
      %p146 = scmp.eq.s32.totalorder %s19, 1
      %p147 = scmp.ne.s32.totalorder %s142, %s144
      %p148 = scmp.eq.s32.totalorder %s19, 0
      %p149 = por %p147, %p148
      %p150 = scmp.ne.s32.totalorder %s142, %s144
      %p151 = scmp.eq.s32.totalorder %s24, 1
      %p152 = por %p150, %p151
      %p153 = scmp.ne.s32.totalorder %s144, %s145
      %p154 = scmp.eq.s32.totalorder %s24, 0
      %p155 = por %p153, %p154
      %p156 = scmp.ne.s32.totalorder %s144, %s145
      %p157 = scmp.eq.s32.totalorder %s25, 1
      %p158 = por %p156, %p157
      %p160 = scmp.ne.s32.totalorder %s145, %s159
      %p161 = scmp.eq.s32.totalorder %s25, 0
      %p162 = por %p160, %p161
      %s163 = ssub.s32 %s19, %s26
      %p164 = scmp.eq.s32.totalorder %s163, 0
      %s166 = sadd.s32 %s165, 1
      %s167 = scalar_select %p164, %s165, %s166
      %p170 = pneg %p164
      %p171 = scmp.eq.s32.totalorder %s19, 1
      %p172 = por %p170, %p171
      %p173 = scmp.ne.s32.totalorder %s165, %s168
      %p174 = scmp.eq.s32.totalorder %s19, 0
      %p175 = por %p173, %p174
      %p176 = scmp.ne.s32.totalorder %s165, %s168
      %p177 = scmp.eq.s32.totalorder %s24, 1
      %p178 = por %p176, %p177
      %p179 = scmp.ne.s32.totalorder %s168, %s169
      %p180 = scmp.eq.s32.totalorder %s24, 0
      %p181 = por %p179, %p180
      %p182 = scmp.ne.s32.totalorder %s168, %s169
      %p183 = scmp.eq.s32.totalorder %s25, 1
      %p184 = por %p182, %p183
      %p186 = scmp.ne.s32.totalorder %s169, %s185
      %p187 = scmp.eq.s32.totalorder %s25, 0
      %p188 = por %p186, %p187
      %p189 = scmp.le.s32.totalorder 1, %s19
      %p190 = scmp.lt.s32.totalorder %s19, 3
      %p191 = pnand %p189, %p190
      %p192 = pneg %p191
      // Predicated region
      $region9: #{tpu_custom_call.1} parent=5 // pred_check
        _
      $region10: #{tpu_custom_call.1} parent=5 // pred_check_branch
        %194 = sbr.rel (%p191) target = $region12
      $region11: #{tpu_custom_call.1} parent=5 // pred_region
        %s195 = ssub.s32 %s19, 1
        // Predicated region
        $region13: #{tpu_custom_call.1} parent=11 // pred_check
          %p196 = pneg %p66
        $region14: #{tpu_custom_call.1} parent=11 // pred_check_branch
          %198 = sbr.rel (%p196) target = $region16
        $region15: #{tpu_custom_call.1} parent=11 // pred_region
          %s200 = ssub.s32 2048, 2048
          %201 = vsyncadd [#allocation6], %s200
          %s202 = sshll.u32 [#allocation5], 4
          %s203 = int_to_ptr.vmem [resolvable:$true] %s202
          %208 = dma.hbm_to_vmem [thread:$0]  %s1, 2048, %s203, [#allocation6], 64, 64, 4
        $region16: #{tpu_custom_call.1} parent=11 // pred_fallthru
          _
        // Predicated region
        $region17: #{tpu_custom_call.1} parent=11 // pred_check
          %p209 = pneg %p87
        $region18: #{tpu_custom_call.1} parent=11 // pred_check_branch
          %211 = sbr.rel (%p209) target = $region20
        $region19: #{tpu_custom_call.1} parent=11 // pred_region
          _
        $region20: #{tpu_custom_call.1} parent=11 // pred_fallthru
          _
        // Predicated region
        $region21: #{tpu_custom_call.1} parent=11 // pred_check
          %p212 = pneg %p134
        $region22: #{tpu_custom_call.1} parent=11 // pred_check_branch
          %214 = sbr.rel (%p212) target = $region24
        $region23: #{tpu_custom_call.1} parent=11 // pred_region
          _
        $region24: #{tpu_custom_call.1} parent=11 // pred_fallthru
          _
        // Predicated region
        $region25: #{tpu_custom_call.1} parent=11 // pred_check
          %p215 = pneg %p155
        $region26: #{tpu_custom_call.1} parent=11 // pred_check_branch
          %217 = sbr.rel (%p215) target = $region28
        $region27: #{tpu_custom_call.1} parent=11 // pred_region
          _
        $region28: #{tpu_custom_call.1} parent=11 // pred_fallthru
          _
      $region12: #{tpu_custom_call.1} parent=5 // pred_fallthru
        _
      %p218 = scmp.lt.s32.totalorder %s19, 2
      // Predicated region
      $region29: #{tpu_custom_call.1} parent=5 // pred_check
        %p219 = pneg %p218
      $region30: #{tpu_custom_call.1} parent=5 // pred_check_branch
        %221 = sbr.rel (%p219) target = $region32
      $region31: #{tpu_custom_call.1} parent=5 // pred_region
        // Predicated region
        $region33: #{tpu_custom_call.1} parent=31 // pred_check
          %p222 = pneg %p39
        $region34: #{tpu_custom_call.1} parent=31 // pred_check_branch
          %224 = sbr.rel (%p222) target = $region36
        $region35: #{tpu_custom_call.1} parent=31 // pred_region
          %s225 = sand.u32 %s19, 1
          %s226 = scalar_lea.sflag [#allocation3], %s225
          %s227 = sand.u32 %s29, 1
          %s228 = smul.addr %s227, 32
          %s229 = scalar_lea.vmem [#allocation2], %s228
          %s230 = smul.u32 2, %s19
          %s232 = ssub.s32 512, 512
          %233 = vsyncadd %s226, %s232
          %s234 = smul.addr %s230, 2
          %s235 = smul.addr %s234, 128
          %s236 = scalar_lea.hbm %s0, %s235
          %s237 = sshll.u32 %s229, 4
          %s238 = int_to_ptr.vmem [resolvable:$true] %s237
          %243 = dma.hbm_to_vmem [thread:$0]  %s236, 512, %s238, %s226, 256, 256, 16
        $region36: #{tpu_custom_call.1} parent=31 // pred_fallthru
          _
        // Predicated region
        $region37: #{tpu_custom_call.1} parent=31 // pred_check
          %p244 = pneg %p107
        $region38: #{tpu_custom_call.1} parent=31 // pred_check_branch
          %246 = sbr.rel (%p244) target = $region40
        $region39: #{tpu_custom_call.1} parent=31 // pred_region
          %s247 = sand.u32 %s19, 1
          %s248 = scalar_lea.sflag [#allocation3], %s247
          %s249 = sand.u32 %s97, 1
          %s250 = smul.addr %s249, 16
          %s251 = scalar_lea.vmem [#allocation7], %s250
          %s252 = smul.u32 2, %s19
          %s254 = ssub.s32 256, 256
          %255 = vsyncadd %s248, %s254
          %s256 = smul.addr %s252, 128
          %s257 = scalar_lea.hbm %s3, %s256
          %s258 = sshll.u32 %s251, 4
          %s259 = int_to_ptr.vmem [resolvable:$true] %s258
          %264 = dma.hbm_to_vmem [thread:$0]  %s257, 256, %s259, %s248, 128, 128, 8
        $region40: #{tpu_custom_call.1} parent=31 // pred_fallthru
          _
      $region32: #{tpu_custom_call.1} parent=5 // pred_fallthru
        _
      %p265 = scmp.le.s32.totalorder 1, %s19
      %p266 = scmp.lt.s32.totalorder %s19, 3
      %p267 = pnand %p265, %p266
      %p268 = pneg %p267
      // Predicated region
      $region41: #{tpu_custom_call.1} parent=5 // pred_check
        _
      $region42: #{tpu_custom_call.1} parent=5 // pred_check_branch
        %270 = sbr.rel (%p267) target = $region44
      $region43: #{tpu_custom_call.1} parent=5 // pred_region
        %s271 = ssub.s32 %s19, 1
        %s272 = sand.u32 %s24, 1
        %s273 = scalar_lea.sflag [#allocation3], %s272
        %s274 = sand.u32 %s32, 1
        %s275 = smul.addr %s274, 32
        %s276 = scalar_lea.vmem [#allocation2], %s275
        // Predicated region
        $region45: #{tpu_custom_call.1} parent=43 // pred_check
          %p277 = pneg %p45
        $region46: #{tpu_custom_call.1} parent=43 // pred_check_branch
          %279 = sbr.rel (%p277) target = $region48
        $region47: #{tpu_custom_call.1} parent=43 // pred_region
          %280 = dma.done %s273, 512
        $region48: #{tpu_custom_call.1} parent=43 // pred_fallthru
          _
        // Predicated region
        $region49: #{tpu_custom_call.1} parent=43 // pred_check
          %p281 = pneg %p66
        $region50: #{tpu_custom_call.1} parent=43 // pred_check_branch
          %283 = sbr.rel (%p281) target = $region52
        $region51: #{tpu_custom_call.1} parent=43 // pred_region
          %284 = dma.done [#allocation6], 2048
        $region52: #{tpu_custom_call.1} parent=43 // pred_fallthru
          _
        %s285 = sand.u32 %s24, 1
        %s286 = scalar_lea.sflag [#allocation3], %s285
        %s287 = sand.u32 %s100, 1
        %s288 = smul.addr %s287, 16
        %s289 = scalar_lea.vmem [#allocation7], %s288
        // Predicated region
        $region53: #{tpu_custom_call.1} parent=43 // pred_check
          %p290 = pneg %p113
        $region54: #{tpu_custom_call.1} parent=43 // pred_check_branch
          %292 = sbr.rel (%p290) target = $region56
        $region55: #{tpu_custom_call.1} parent=43 // pred_region
          %293 = dma.done %s286, 256
        $region56: #{tpu_custom_call.1} parent=43 // pred_fallthru
          _
        %s294 = sand.u32 %s24, 1
        %s295 = scalar_lea.sflag [#allocation3], %s294
        %s296 = sand.u32 %s32, 1
        %s297 = smul.addr %s296, 32
        %s298 = scalar_lea.vmem [#allocation2], %s297
        %p299 = pneg %p45
        %p300 = pneg %p42
        %p301 = pneg %p66
        %p302 = pneg %p63
        %p303 = pneg %p87
        %p304 = pneg %p84
        %s305 = sand.u32 %s24, 1
        %s306 = scalar_lea.sflag [#allocation3], %s305
        %s307 = sand.u32 %s100, 1
        %s308 = smul.addr %s307, 16
        %s309 = scalar_lea.vmem [#allocation7], %s308
        %p310 = pneg %p113
        %p311 = pneg %p110
        %p312 = pneg %p134
        %p313 = pneg %p131
        %p314 = pneg %p155
        %p315 = pneg %p152
        %p316 = pneg %p181
        %p317 = pneg %p178
        %s318 = sand.u32 %s168, 1
        %s319 = scalar_lea.sflag [#allocation4], %s318
        %s320 = sand.u32 %s168, 1
        %s321 = smul.addr %s320, 16
        %s322 = scalar_lea.vmem [#allocation8], %s321
        %s323 = smul.u32 2, %s24
        %s324 = smul.u32 2, %s24
        %s325 = smul.u32 2, %s24
        %v327 = vld [vmem:[%s276] sm:$0xff]
        %v328 = vld [vmem:[%s276 + $0x8] sm:$0xff]
        %v329 = vld [vmem:[%s276 + $0x10] sm:$0xff]
        %v330 = vld [vmem:[%s276 + $0x18] sm:$0xff]
        %v331 = vpack.c.bf16 %v329, %v327
        %v332 = vpack.c.bf16 %v330, %v328
        %v333 = vld [vmem:[#allocation5] sm:$0xf]
        %v334 = vld [vmem:[#allocation5 + $0x4] sm:$0xf]
        %v335 = vld [vmem:[#allocation5 + $0x8] sm:$0xf]
        %v336 = vld [vmem:[#allocation5 + $0xc] sm:$0xf]
        %v337 = vld [vmem:[#allocation5 + $0x10] sm:$0xf]
        %v338 = vld [vmem:[#allocation5 + $0x14] sm:$0xf]
        %v339 = vld [vmem:[#allocation5 + $0x18] sm:$0xf]
        %v340 = vld [vmem:[#allocation5 + $0x1c] sm:$0xf]
        %v341 = vld [vmem:[#allocation5 + $0x20] sm:$0xf]
        %v342 = vld [vmem:[#allocation5 + $0x24] sm:$0xf]
        %v343 = vld [vmem:[#allocation5 + $0x28] sm:$0xf]
        %v344 = vld [vmem:[#allocation5 + $0x2c] sm:$0xf]
        %v345 = vld [vmem:[#allocation5 + $0x30] sm:$0xf]
        %v346 = vld [vmem:[#allocation5 + $0x34] sm:$0xf]
        %v347 = vld [vmem:[#allocation5 + $0x38] sm:$0xf]
        %v348 = vld [vmem:[#allocation5 + $0x3c] sm:$0xf]
        %v349 = vld [vmem:[#allocation5 + $0x40] sm:$0xf]
        %v350 = vld [vmem:[#allocation5 + $0x44] sm:$0xf]
        %v351 = vld [vmem:[#allocation5 + $0x48] sm:$0xf]
        %v352 = vld [vmem:[#allocation5 + $0x4c] sm:$0xf]
        %v353 = vld [vmem:[#allocation5 + $0x50] sm:$0xf]
        %v354 = vld [vmem:[#allocation5 + $0x54] sm:$0xf]
        %v355 = vld [vmem:[#allocation5 + $0x58] sm:$0xf]
        %v356 = vld [vmem:[#allocation5 + $0x5c] sm:$0xf]
        %v357 = vld [vmem:[#allocation5 + $0x60] sm:$0xf]
        %v358 = vld [vmem:[#allocation5 + $0x64] sm:$0xf]
        %v359 = vld [vmem:[#allocation5 + $0x68] sm:$0xf]
        %v360 = vld [vmem:[#allocation5 + $0x6c] sm:$0xf]
        %v361 = vld [vmem:[#allocation5 + $0x70] sm:$0xf]
        %v362 = vld [vmem:[#allocation5 + $0x74] sm:$0xf]
        %v363 = vld [vmem:[#allocation5 + $0x78] sm:$0xf]
        %v364 = vld [vmem:[#allocation5 + $0x7c] sm:$0xf]
        %v365 = vld [vmem:[%s2] sm:$0x1]
        %v367 = vlaneseq
        %v368 = vshrl.u32 %v367, 7
        %v369 = vsub.s32 0, %v368
        %v370 = vrot.slane %v365, %v369
        %v404 = vunpack.c.l.b16 %v333
        %v405 = vunpack.c.l.b16 %v334
        %v406 = vunpack.c.l.b16 %v335
        %v407 = vunpack.c.l.b16 %v336
        %v408 = vunpack.c.l.b16 %v337
        %v409 = vunpack.c.l.b16 %v338
        %v410 = vunpack.c.l.b16 %v339
        %v411 = vunpack.c.l.b16 %v340
        %v412 = vunpack.c.l.b16 %v341
        %v413 = vunpack.c.l.b16 %v342
        %v414 = vunpack.c.l.b16 %v343
        %v415 = vunpack.c.l.b16 %v344
        %v416 = vunpack.c.l.b16 %v345
        %v417 = vunpack.c.l.b16 %v346
        %v418 = vunpack.c.l.b16 %v347
        %v419 = vunpack.c.l.b16 %v348
        %v420 = vunpack.c.l.b16 %v349
        %v421 = vunpack.c.l.b16 %v350
        %v422 = vunpack.c.l.b16 %v351
        %v423 = vunpack.c.l.b16 %v352
        %v424 = vunpack.c.l.b16 %v353
        %v425 = vunpack.c.l.b16 %v354
        %v426 = vunpack.c.l.b16 %v355
        %v427 = vunpack.c.l.b16 %v356
        %v428 = vunpack.c.l.b16 %v357
        %v429 = vunpack.c.l.b16 %v358
        %v430 = vunpack.c.l.b16 %v359
        %v431 = vunpack.c.l.b16 %v360
        %v432 = vunpack.c.l.b16 %v361
        %v433 = vunpack.c.l.b16 %v362
        %v434 = vunpack.c.l.b16 %v363
        %v435 = vunpack.c.l.b16 %v364
        %v436 = vpack.c.b16 %v405, %v404
        %v437 = vpack.c.b16 %v407, %v406
        %v438 = vpack.c.b16 %v409, %v408
        %v439 = vpack.c.b16 %v411, %v410
        %v440 = vpack.c.b16 %v413, %v412
        %v441 = vpack.c.b16 %v415, %v414
        %v442 = vpack.c.b16 %v417, %v416
        %v443 = vpack.c.b16 %v419, %v418
        %v444 = vpack.c.b16 %v421, %v420
        %v445 = vpack.c.b16 %v423, %v422
        %v446 = vpack.c.b16 %v425, %v424
        %v447 = vpack.c.b16 %v427, %v426
        %v448 = vpack.c.b16 %v429, %v428
        %v449 = vpack.c.b16 %v431, %v430
        %v450 = vpack.c.b16 %v433, %v432
        %v451 = vpack.c.b16 %v435, %v434
        %468 = vmatprep.subr.bf16.mxu0 0
        %469 = vmatpush1.bf16.msra.mxu0 %v436
        %470 = vmatprep.subr.bf16.mxu0 0
        %471 = vmatpush1.bf16.msra.mxu0 %v437
        %472 = vmatprep.subr.bf16.mxu0 0
        %473 = vmatpush1.bf16.msra.mxu0 %v438
        %474 = vmatprep.subr.bf16.mxu0 0
        %475 = vmatpush1.bf16.msra.mxu0 %v439
        %476 = vmatprep.subr.bf16.mxu0 0
        %477 = vmatpush1.bf16.msra.mxu0 %v440
        %478 = vmatprep.subr.bf16.mxu0 0
        %479 = vmatpush1.bf16.msra.mxu0 %v441
        %480 = vmatprep.subr.bf16.mxu0 0
        %481 = vmatpush1.bf16.msra.mxu0 %v442
        %482 = vmatprep.subr.bf16.mxu0 0
        %483 = vmatpush1.bf16.msra.mxu0 %v443
        %484 = vmatprep.subr.bf16.mxu0 0
        %485 = vmatpush1.bf16.msra.mxu0 %v444
        %486 = vmatprep.subr.bf16.mxu0 0
        %487 = vmatpush1.bf16.msra.mxu0 %v445
        %488 = vmatprep.subr.bf16.mxu0 0
        %489 = vmatpush1.bf16.msra.mxu0 %v446
        %490 = vmatprep.subr.bf16.mxu0 0
        %491 = vmatpush1.bf16.msra.mxu0 %v447
        %492 = vmatprep.subr.bf16.mxu0 0
        %493 = vmatpush1.bf16.msra.mxu0 %v448
        %494 = vmatprep.subr.bf16.mxu0 0
        %495 = vmatpush1.bf16.msra.mxu0 %v449
        %496 = vmatprep.subr.bf16.mxu0 0
        %497 = vmatpush1.bf16.msra.mxu0 %v450
        %498 = vmatprep.subr.bf16.mxu0 0
        %499 = vmatpush1.bf16.msra.mxu0 %v451
        %500 = vmatprep.mubr.bf16.mxu0 %v332
        %501 = vmatmul.mubr.bf16.gmra.mrb[0].mxu0 %v331
        %v502 = vpop.f32.mrb[0].mxu0
        %v503 = vadd.f32 %v370, %v502
        %v504 = vpop.f32.mrb[0].mxu0
        %v505 = vpop.f32.mrb[0].mxu0
        %v506 = vadd.f32 %v370, %v505
        %v507 = vpop.f32.mrb[0].mxu0
        %508 = vdwg.mxu0
        %v509 = vld [vmem:[%s289] sm:$0xff]
        %v510 = vld [vmem:[%s289 + $0x8] sm:$0xff]
        %v511 = vadd.f32 %v503, %v509
        %v512 = vadd.f32 %v506, %v510
        %v513 = vld [vmem:[%s4] sm:$0x1]
        %v514 = vld [vmem:[%s5] sm:$0x1]
        %515 = vadd.xlane.f32.xlu0 %v511
        %v516 = vpop.xlane.xlu0 %515
        %517 = vadd.xlane.f32.xlu0 %v512
        %v518 = vpop.xlane.xlu0 %517
        %v519 = vmul.f32 %v516, 0.0078125
        %v520 = vmul.f32 %v518, 0.0078125
        %v521 = vsub.f32 %v511, %v519
        %v522 = vsub.f32 %v512, %v520
        %v523 = vmul.f32 %v521, %v521
        %v524 = vmul.f32 %v522, %v522
        %525 = vadd.xlane.f32.xlu0 %v523
        %v526 = vpop.xlane.xlu0 %525
        %527 = vadd.xlane.f32.xlu0 %v524
        %v528 = vpop.xlane.xlu0 %527
        %v529 = vmul.f32 %v526, 0.0078125
        %v530 = vmul.f32 %v528, 0.0078125
        %v531 = vadd.f32 %v529, 1e-12
        %v532 = vadd.f32 %v530, 1e-12
        %v533 = vrsqrt.pop %v531
        %v534 = vrsqrt.pop %v532
        %v535 = vmul.f32 %v521, %v533
        %v536 = vmul.f32 %v522, %v534
        %v538 = vlaneseq
        %v539 = vshrl.u32 %v538, 7
        %v540 = vsub.s32 0, %v539
        %v541 = vrot.slane %v513, %v540
        %v543 = vmul.f32 %v535, %v541
        %v544 = vmul.f32 %v536, %v541
        %v546 = vlaneseq
        %v547 = vshrl.u32 %v546, 7
        %v548 = vsub.s32 0, %v547
        %v549 = vrot.slane %v514, %v548
        %v551 = vadd.f32 %v543, %v549
        %v552 = vadd.f32 %v544, %v549
        %553 = vst [vmem:[%s322] sm:$0xff] %v551
        %554 = vst [vmem:[%s322 + $0x8] sm:$0xff] %v552
        %s555 = sand.u32 %s168, 1
        %s556 = scalar_lea.sflag [#allocation4], %s555
        %s557 = sand.u32 %s168, 1
        %s558 = smul.addr %s557, 16
        %s559 = scalar_lea.vmem [#allocation8], %s558
        // Predicated region
        $region57: #{tpu_custom_call.1} parent=43 // pred_check
          %p560 = pneg %p178
        $region58: #{tpu_custom_call.1} parent=43 // pred_check_branch
          %562 = sbr.rel (%p560) target = $region60
        $region59: #{tpu_custom_call.1} parent=43 // pred_region
          %s563 = smul.u32 2, %s24
          %s565 = ssub.s32 256, 256
          %566 = vsyncadd %s556, %s565
          %s567 = smul.addr %s563, 128
          %s568 = scalar_lea.hbm %s6, %s567
          %s569 = sshll.u32 %s559, 4
          %s570 = int_to_ptr.vmem [resolvable:$true] %s569
          %575 = dma.vmem_to_hbm [thread:$0]  %s570, 256, %s568, %s556, 128, 128, 8
        $region60: #{tpu_custom_call.1} parent=43 // pred_fallthru
          _
      $region44: #{tpu_custom_call.1} parent=5 // pred_fallthru
        _
      %p576 = scmp.le.s32.totalorder 2, %s19
      // Predicated region
      $region61: #{tpu_custom_call.1} parent=5 // pred_check
        %p577 = pneg %p576
      $region62: #{tpu_custom_call.1} parent=5 // pred_check_branch
        %579 = sbr.rel (%p577) target = $region64
      $region63: #{tpu_custom_call.1} parent=5 // pred_region
        %s580 = ssub.s32 %s19, 2
        // Predicated region
        $region65: #{tpu_custom_call.1} parent=63 // pred_check
          %p581 = pneg %p184
        $region66: #{tpu_custom_call.1} parent=63 // pred_check_branch
          %583 = sbr.rel (%p581) target = $region68
        $region67: #{tpu_custom_call.1} parent=63 // pred_region
          %s584 = sand.u32 %s169, 1
          %s585 = scalar_lea.sflag [#allocation4], %s584
          %s586 = sand.u32 %s169, 1
          %s587 = smul.addr %s586, 16
          %s588 = scalar_lea.vmem [#allocation8], %s587
          %589 = dma.done %s585, 256
        $region68: #{tpu_custom_call.1} parent=63 // pred_fallthru
          _
      $region64: #{tpu_custom_call.1} parent=5 // pred_fallthru
        _
    $region6: #{tpu_custom_call.1} parent=1 // loop_footer
      %s23 = sadd.s32 1, %s19
    $region7: #{tpu_custom_call.1} parent=1 // loop_footer_branch
      %18 = sbr.rel target = $region3
    $region8: #{tpu_custom_call.1} parent=1 // loop_exit
      _
    %590 = vsyncpa [#allocation3], 1
    %s591 = scalar_lea.sflag [#allocation3], 1
    %592 = vsyncpa %s591, 1
    %593 = vsyncpa [#allocation6], 1
    %594 = vsyncpa [#allocation4], 1
    %s595 = scalar_lea.sflag [#allocation4], 1
    %596 = vsyncpa %s595, 1

</llo_original>
